<compile_context>
chip_gen: v6e
topology: v6e:2x2x1
jax: 0.10.0
libtpu: 0.0.40
codegen_flags: <defaults>
</compile_context>

<pallas_src>
import math
from functools import partial

import jax
import jax.numpy as jnp
from jax.experimental import pallas as pl
from jax.experimental.pallas import tpu as pltpu

_LANE = 128
_SUBLANE = 8


def _round_up(n, m):
    return ((n + m - 1) // m) * m


def _pad2d(a, rows, cols):
    r, c = a.shape
    return jnp.pad(a, ((0, rows - r), (0, cols - c)))


def _pad1d(a, n):
    return jnp.pad(a, (0, n - a.shape[0]))


# ---------------------------------------------------------------------------
# Kernel: fused 3-layer noisy MLP over one batch tile.
# ---------------------------------------------------------------------------
def _noisy_mlp_kernel(x_ref,
                      w1_ref, v1_ref, w2_ref, v2_ref, w3_ref, v3_ref,
                      o_ref, *, matmul_dtype, out_pads):
    out1, out2, out3 = out_pads

    def noisy_linear(x, w_ref, v_ref, out_p):
        # w_ref: (in_p, 2*out_p) = [W_mu^T | (W_sigma*eps_in)^T], matmul_dtype.
        # v_ref: (2, out_p) f32  = [eps_out ; b_mu + b_sigma*eps_out].
        # Single MXU matmul (K = in_p, N = 2*out_p), f32 accumulation.
        y = jnp.dot(x.astype(matmul_dtype), w_ref[...],
                    preferred_element_type=jnp.float32)      # (tb, 2*out_p)
        mu = y[:, :out_p]            # x @ W_mu^T
        sig = y[:, out_p:]           # (x * eps_in) @ W_sigma^T  (eps_in folded)
        eps_out = v_ref[0:1, :]      # (1, out_p), broadcast over batch sublanes
        b_eff = v_ref[1:2, :]        # b_mu + b_sigma * eps_out
        return mu + sig * eps_out + b_eff

    h1 = jnp.maximum(noisy_linear(x_ref[...], w1_ref, v1_ref, out1), 0.0)
    h2 = jnp.maximum(noisy_linear(h1, w2_ref, v2_ref, out2), 0.0)
    o_ref[...] = noisy_linear(h2, w3_ref, v3_ref, out3).astype(o_ref.dtype)


# ---------------------------------------------------------------------------
# One-time parameter preparation (the analogue of sample_noise(), NOT forward)
# ---------------------------------------------------------------------------
def prepare_noisy_params(params, *, matmul_dtype=jnp.bfloat16):
    """Fold / pad / transpose / cast the noisy-layer parameters once.

    Re-run only when parameters change or noise is resampled. Per layer:
      w: (in_p, 2*out_p) matmul_dtype  = [W_mu^T | (W_sigma * eps_in)^T], padded
      v: (2, out_p)      f32           = [eps_out ; b_mu + b_sigma * eps_out]
    """
    layers = []
    for name in ("layer1", "layer2", "output"):
        p = params[name]
        out_d, in_d = p["weight_mu"].shape
        in_p = _round_up(in_d, _LANE)
        out_p = _round_up(out_d, _LANE)
        w_mu_t = _pad2d(p["weight_mu"].T, in_p, out_p)
        w_sig_t = _pad2d((p["weight_sigma"] * p["eps_in"][None, :]).T,
                         in_p, out_p)
        w = jnp.concatenate([w_mu_t, w_sig_t], axis=1).astype(matmul_dtype)
        eps_out = _pad1d(p["eps_out"], out_p)
        b_eff = _pad1d(p["bias_mu"] + p["bias_sigma"] * p["eps_out"], out_p)
        v = jnp.stack([eps_out, b_eff], axis=0).astype(jnp.float32)
        layers.append(dict(w=w, v=v, in_d=in_d, out_d=out_d,
                           in_p=in_p, out_p=out_p))
    return dict(layers=layers)


# ---------------------------------------------------------------------------
# Forward wrapper
# ---------------------------------------------------------------------------
def noisy_network_forward(state, prepared, *, batch_tile=None):
    """Fused forward q = L3(relu(L2(relu(L1(state))))) in one pallas_call.

    batch_tile:
      None -> one grid step for the whole (sublane-padded) batch when it is
              <= 512 rows (best on single-TC v5e/v6e), else 256-row tiles.
      int  -> explicit tile (rounded to a multiple of 8). On v7x pick a tile
              giving >= 2 grid steps so the 'parallel' batch axis shards
              across both TensorCores.
    """
    l1, l2, l3 = prepared["layers"]
    batch, state_dim = state.shape
    assert state_dim == l1["in_d"], (state_dim, l1["in_d"])

    b8 = _round_up(batch, _SUBLANE)
    if batch_tile is None:
        batch_tile = b8 if b8 <= 512 else 256
    tb = max(_SUBLANE, min(_round_up(batch_tile, _SUBLANE), b8))
    b_p = _round_up(b8, tb)

    matmul_dtype = l1["w"].dtype
    x_p = _pad2d(state.astype(jnp.float32), b_p, l1["in_p"])

    def invariant(shape):
        # Grid-invariant block: constant index_map -> DMA'd once over the grid.
        return pl.BlockSpec(shape, lambda i: (0,) * len(shape))

    in_specs = [pl.BlockSpec((tb, l1["in_p"]), lambda i: (i, 0))]
    args = [x_p]
    for l in (l1, l2, l3):
        in_specs.append(invariant((l["in_p"], 2 * l["out_p"])))
        in_specs.append(invariant((2, l["out_p"])))
        args += [l["w"], l["v"]]

    # Explicit VMEM budget (double-buffer worst case + activation temps) with
    # headroom, clamped so the same code stays safe on v7x's 64 MiB VMEM.
    wbytes = sum(l["in_p"] * 2 * l["out_p"] for l in (l1, l2, l3)) \
        * matmul_dtype.itemsize * 2
    vbytes = sum(2 * l["out_p"] for l in (l1, l2, l3)) * 4 * 2
    iobytes = (tb * l1["in_p"] + tb * l3["out_p"]) * 4 * 2
    actbytes = tb * max(2 * l["out_p"] for l in (l1, l2, l3)) * 4 * 6
    vmem_limit = int(min(96 << 20,
                         max(32 << 20,
                             2 * (wbytes + vbytes + iobytes + actbytes))))

    out_padded = pl.pallas_call(
        partial(_noisy_mlp_kernel, matmul_dtype=matmul_dtype,
                out_pads=(l1["out_p"], l2["out_p"], l3["out_p"])),
        out_shape=jax.ShapeDtypeStruct((b_p, l3["out_p"]), jnp.float32),
        grid=(b_p // tb,),
        in_specs=in_specs,
        out_specs=pl.BlockSpec((tb, l3["out_p"]), lambda i: (i, 0)),
        compiler_params=pltpu.CompilerParams(
            dimension_semantics=("parallel",),
            vmem_limit_bytes=vmem_limit),
    )(*args)

    return out_padded[:batch, :l3["out_d"]]


# ---------------------------------------------------------------------------
# Parameter / noise initialisation (plain JAX, mirrors __init__ +
# reset_parameters + sample_noise of the PyTorch module).
# ---------------------------------------------------------------------------
def _f(x):
    # f(x) = sign(x) * sqrt(|x|)
    return jnp.sign(x) * jnp.sqrt(jnp.abs(x))


def init_noisy_layer(key, in_features, out_features, sigma_init=0.5):
    k_wmu, k_bmu, k_ein, k_eout = jax.random.split(key, 4)
    bound = 1.0 / math.sqrt(in_features)
    sigma0 = sigma_init / math.sqrt(in_features)
    return dict(
        weight_mu=jax.random.uniform(
            k_wmu, (out_features, in_features), jnp.float32, -bound, bound),
        weight_sigma=jnp.full((out_features, in_features), sigma0, jnp.float32),
        bias_mu=jax.random.uniform(
            k_bmu, (out_features,), jnp.float32, -bound, bound),
        bias_sigma=jnp.full((out_features,), sigma0, jnp.float32),
        # Factorised noise kept in rank-1 form; the dense
        # weight_epsilon = outer(eps_out, eps_in) is never materialised.
        eps_in=_f(jax.random.normal(k_ein, (in_features,), jnp.float32)),
        eps_out=_f(jax.random.normal(k_eout, (out_features,), jnp.float32)),
    )


def init_noisy_network(key, state_dim, action_dim, hidden_dim=128):
    k1, k2, k3 = jax.random.split(key, 3)
    return dict(
        layer1=init_noisy_layer(k1, state_dim, hidden_dim),
        layer2=init_noisy_layer(k2, hidden_dim, hidden_dim),
        output=init_noisy_layer(k3, hidden_dim, action_dim),
    )


# Pure-JAX reference (dense weight_epsilon, exactly like the PyTorch forward).
def _ref_layer(x, p):
    w_eps = jnp.outer(p["eps_out"], p["eps_in"])
    w = p["weight_mu"] + p["weight_sigma"] * w_eps
    b = p["bias_mu"] + p["bias_sigma"] * p["eps_out"]
    return x @ w.T + b


def noisy_network_ref(state, params):
    h1 = jnp.maximum(_ref_layer(state, params["layer1"]), 0.0)
    h2 = jnp.maximum(_ref_layer(h1, params["layer2"]), 0.0)
    return _ref_layer(h2, params["output"])


if __name__ == "__main__":
    key = jax.random.PRNGKey(0)
    k_params, k_x1, k_x2 = jax.random.split(key, 3)

    batch, state_dim, action_dim, hidden_dim = 8, 8, 4, 128
    params = init_noisy_network(k_params, state_dim, action_dim, hidden_dim)
    state = jax.random.normal(k_x1, (batch, state_dim), jnp.float32)
    ref = noisy_network_ref(state, params)

    # Exact path: f32 MXU operands, single grid step.
    prepared_f32 = prepare_noisy_params(params, matmul_dtype=jnp.float32)
    q32 = jax.block_until_ready(noisy_network_forward(state, prepared_f32))
    assert q32.shape == (batch, action_dim)
    assert jnp.allclose(q32, ref, atol=1e-4, rtol=1e-4), (
        float(jnp.max(jnp.abs(q32 - ref))))

    # Default fast path: bf16 MXU operands prepared once host-side
    # (f32 accumulation) -> expected bf16 rounding, looser tolerance.
    prepared_bf16 = prepare_noisy_params(params)
    q16 = jax.block_until_ready(noisy_network_forward(state, prepared_bf16))
    assert q16.shape == (batch, action_dim)
    assert jnp.allclose(q16, ref, atol=3e-2, rtol=3e-2), (
        float(jnp.max(jnp.abs(q16 - ref))))

    # Multi-step "parallel" batch grid (megacore-friendly path on v7x),
    # batch not a multiple of the sublane/tile size.
    batch2 = 20
    state2 = jax.random.normal(k_x2, (batch2, state_dim), jnp.float32)
    ref2 = noisy_network_ref(state2, params)
    q2 = jax.block_until_ready(
        noisy_network_forward(state2, prepared_f32, batch_tile=8))
    assert q2.shape == (batch2, action_dim)
    assert jnp.allclose(q2, ref2, atol=1e-4, rtol=1e-4), (
        float(jnp.max(jnp.abs(q2 - ref2))))

    print("KERNEL_OK")
</pallas_src>

<mosaic_0001>
module attributes {stable_mosaic.version = 11 : i64} {
  func.func @_noisy_mlp_kernel(%arg0: i32, %arg1: memref<8x128xf32, #tpu.memory_space<vmem>>, %arg2: memref<128x256xf32, #tpu.memory_space<vmem>>, %arg3: memref<2x128xf32, #tpu.memory_space<vmem>>, %arg4: memref<128x256xf32, #tpu.memory_space<vmem>>, %arg5: memref<2x128xf32, #tpu.memory_space<vmem>>, %arg6: memref<128x256xf32, #tpu.memory_space<vmem>>, %arg7: memref<2x128xf32, #tpu.memory_space<vmem>>, %arg8: memref<8x128xf32, #tpu.memory_space<vmem>>) attributes {dimension_semantics = [#tpu.dimension_semantics<parallel>], iteration_bounds = array<i64: 1>, scalar_prefetch = 0 : i64, scratch_operands = 0 : i64, tpu.core_type = #tpu.core_type<tc>, window_params = [{transform_indices = @transform_0, window_bounds = array<i64: 8, 128>}, {pipeline_mode = #tpu.pipeline_mode<synchronous>, transform_indices = @transform_1, window_bounds = array<i64: 128, 256>}, {pipeline_mode = #tpu.pipeline_mode<synchronous>, transform_indices = @transform_2, window_bounds = array<i64: 2, 128>}, {pipeline_mode = #tpu.pipeline_mode<synchronous>, transform_indices = @transform_3, window_bounds = array<i64: 128, 256>}, {pipeline_mode = #tpu.pipeline_mode<synchronous>, transform_indices = @transform_4, window_bounds = array<i64: 2, 128>}, {pipeline_mode = #tpu.pipeline_mode<synchronous>, transform_indices = @transform_5, window_bounds = array<i64: 128, 256>}, {pipeline_mode = #tpu.pipeline_mode<synchronous>, transform_indices = @transform_6, window_bounds = array<i64: 2, 128>}, {transform_indices = @transform_7, window_bounds = array<i64: 8, 128>}]} {
    %c0 = arith.constant 0 : index
    %c0_0 = arith.constant 0 : index
    %0 = vector.load %arg1[%c0, %c0_0] : memref<8x128xf32, #tpu.memory_space<vmem>>, vector<8x128xf32>
    %c0_1 = arith.constant 0 : index
    %c0_2 = arith.constant 0 : index
    %1 = vector.load %arg2[%c0_1, %c0_2] : memref<128x256xf32, #tpu.memory_space<vmem>>, vector<128x256xf32>
    %cst = arith.constant dense<0.000000e+00> : vector<8x256xf32>
    %2 = tpu.matmul %0, %1, %cst {dimension_numbers = #tpu.dot_dimension_numbers<[1], [0], [0], [1], [0, 0, 1, 1], [], []>} : vector<8x128xf32>, vector<128x256xf32>, vector<8x256xf32> -> vector<8x256xf32>
    %3 = vector.extract_strided_slice %2 {offsets = [0, 0], sizes = [8, 128], strides = [1, 1]} : vector<8x256xf32> to vector<8x128xf32>
    %4 = vector.extract_strided_slice %2 {offsets = [0, 128], sizes = [8, 128], strides = [1, 1]} : vector<8x256xf32> to vector<8x128xf32>
    %c0_3 = arith.constant 0 : index
    %c0_4 = arith.constant 0 : index
    %5 = vector.load %arg3[%c0_3, %c0_4] : memref<2x128xf32, #tpu.memory_space<vmem>>, vector<1x128xf32>
    %c1 = arith.constant 1 : index
    %c0_5 = arith.constant 0 : index
    %6 = vector.load %arg3[%c1, %c0_5] : memref<2x128xf32, #tpu.memory_space<vmem>>, vector<1x128xf32>
    %7 = vector.broadcast %5 : vector<1x128xf32> to vector<8x128xf32>
    %8 = arith.mulf %4, %7 : vector<8x128xf32>
    %9 = arith.addf %3, %8 : vector<8x128xf32>
    %10 = vector.broadcast %6 : vector<1x128xf32> to vector<8x128xf32>
    %11 = arith.addf %9, %10 : vector<8x128xf32>
    %cst_6 = arith.constant 0.000000e+00 : f32
    %12 = vector.broadcast %cst_6 : f32 to vector<8x128xf32>
    %13 = arith.maximumf %11, %12 : vector<8x128xf32>
    %c0_7 = arith.constant 0 : index
    %c0_8 = arith.constant 0 : index
    %14 = vector.load %arg4[%c0_7, %c0_8] : memref<128x256xf32, #tpu.memory_space<vmem>>, vector<128x256xf32>
    %cst_9 = arith.constant dense<0.000000e+00> : vector<8x256xf32>
    %15 = tpu.matmul %13, %14, %cst_9 {dimension_numbers = #tpu.dot_dimension_numbers<[1], [0], [0], [1], [0, 0, 1, 1], [], []>} : vector<8x128xf32>, vector<128x256xf32>, vector<8x256xf32> -> vector<8x256xf32>
    %16 = vector.extract_strided_slice %15 {offsets = [0, 0], sizes = [8, 128], strides = [1, 1]} : vector<8x256xf32> to vector<8x128xf32>
    %17 = vector.extract_strided_slice %15 {offsets = [0, 128], sizes = [8, 128], strides = [1, 1]} : vector<8x256xf32> to vector<8x128xf32>
    %c0_10 = arith.constant 0 : index
    %c0_11 = arith.constant 0 : index
    %18 = vector.load %arg5[%c0_10, %c0_11] : memref<2x128xf32, #tpu.memory_space<vmem>>, vector<1x128xf32>
    %c1_12 = arith.constant 1 : index
    %c0_13 = arith.constant 0 : index
    %19 = vector.load %arg5[%c1_12, %c0_13] : memref<2x128xf32, #tpu.memory_space<vmem>>, vector<1x128xf32>
    %20 = vector.broadcast %18 : vector<1x128xf32> to vector<8x128xf32>
    %21 = arith.mulf %17, %20 : vector<8x128xf32>
    %22 = arith.addf %16, %21 : vector<8x128xf32>
    %23 = vector.broadcast %19 : vector<1x128xf32> to vector<8x128xf32>
    %24 = arith.addf %22, %23 : vector<8x128xf32>
    %cst_14 = arith.constant 0.000000e+00 : f32
    %25 = vector.broadcast %cst_14 : f32 to vector<8x128xf32>
    %26 = arith.maximumf %24, %25 : vector<8x128xf32>
    %c0_15 = arith.constant 0 : index
    %c0_16 = arith.constant 0 : index
    %27 = vector.load %arg6[%c0_15, %c0_16] : memref<128x256xf32, #tpu.memory_space<vmem>>, vector<128x256xf32>
    %cst_17 = arith.constant dense<0.000000e+00> : vector<8x256xf32>
    %28 = tpu.matmul %26, %27, %cst_17 {dimension_numbers = #tpu.dot_dimension_numbers<[1], [0], [0], [1], [0, 0, 1, 1], [], []>} : vector<8x128xf32>, vector<128x256xf32>, vector<8x256xf32> -> vector<8x256xf32>
    %29 = vector.extract_strided_slice %28 {offsets = [0, 0], sizes = [8, 128], strides = [1, 1]} : vector<8x256xf32> to vector<8x128xf32>
    %30 = vector.extract_strided_slice %28 {offsets = [0, 128], sizes = [8, 128], strides = [1, 1]} : vector<8x256xf32> to vector<8x128xf32>
    %c0_18 = arith.constant 0 : index
    %c0_19 = arith.constant 0 : index
    %31 = vector.load %arg7[%c0_18, %c0_19] : memref<2x128xf32, #tpu.memory_space<vmem>>, vector<1x128xf32>
    %c1_20 = arith.constant 1 : index
    %c0_21 = arith.constant 0 : index
    %32 = vector.load %arg7[%c1_20, %c0_21] : memref<2x128xf32, #tpu.memory_space<vmem>>, vector<1x128xf32>
    %33 = vector.broadcast %31 : vector<1x128xf32> to vector<8x128xf32>
    %34 = arith.mulf %30, %33 : vector<8x128xf32>
    %35 = arith.addf %29, %34 : vector<8x128xf32>
    %36 = vector.broadcast %32 : vector<1x128xf32> to vector<8x128xf32>
    %37 = arith.addf %35, %36 : vector<8x128xf32>
    %c0_22 = arith.constant 0 : index
    %c0_23 = arith.constant 0 : index
    %38 = vector.load %arg8[%c0_22, %c0_23] : memref<8x128xf32, #tpu.memory_space<vmem>>, vector<8x128xf32>
    tpu.vector_store %arg8[%c0_22, %c0_23], %37 {strides = array<i32>} : memref<8x128xf32, #tpu.memory_space<vmem>>, vector<8x128xf32>,
    return
  }
  func.func @transform_0(%arg0: i32) -> (i32, i32) {
    %c0_i32 = arith.constant 0 : i32
    %c0_i32_0 = arith.constant 0 : i32
    return %arg0, %c0_i32 : i32, i32
  }
  func.func @transform_1(%arg0: i32) -> (i32, i32) {
    %c0_i32 = arith.constant 0 : i32
    %c0_i32_0 = arith.constant 0 : i32
    %c0_i32_1 = arith.constant 0 : i32
    return %c0_i32, %c0_i32_0 : i32, i32
  }
  func.func @transform_2(%arg0: i32) -> (i32, i32) {
    %c0_i32 = arith.constant 0 : i32
    %c0_i32_0 = arith.constant 0 : i32
    %c0_i32_1 = arith.constant 0 : i32
    return %c0_i32, %c0_i32_0 : i32, i32
  }
  func.func @transform_3(%arg0: i32) -> (i32, i32) {
    %c0_i32 = arith.constant 0 : i32
    %c0_i32_0 = arith.constant 0 : i32
    %c0_i32_1 = arith.constant 0 : i32
    return %c0_i32, %c0_i32_0 : i32, i32
  }
  func.func @transform_4(%arg0: i32) -> (i32, i32) {
    %c0_i32 = arith.constant 0 : i32
    %c0_i32_0 = arith.constant 0 : i32
    %c0_i32_1 = arith.constant 0 : i32
    return %c0_i32, %c0_i32_0 : i32, i32
  }
  func.func @transform_5(%arg0: i32) -> (i32, i32) {
    %c0_i32 = arith.constant 0 : i32
    %c0_i32_0 = arith.constant 0 : i32
    %c0_i32_1 = arith.constant 0 : i32
    return %c0_i32, %c0_i32_0 : i32, i32
  }
  func.func @transform_6(%arg0: i32) -> (i32, i32) {
    %c0_i32 = arith.constant 0 : i32
    %c0_i32_0 = arith.constant 0 : i32
    %c0_i32_1 = arith.constant 0 : i32
    return %c0_i32, %c0_i32_0 : i32, i32
  }
  func.func @transform_7(%arg0: i32) -> (i32, i32) {
    %c0_i32 = arith.constant 0 : i32
    %c0_i32_0 = arith.constant 0 : i32
    return %arg0, %c0_i32 : i32, i32
  }
}

</mosaic_0001>

<llo_original>
// kernel: tpu_custom_call.1
$region0: #{tpu_custom_call.1}
  #allocation0 [shape = 'u32[]', space=smem, size = 0x4, offset = 0x4, fixed_abs, tag = 'smem constant byte address 0x4 - core index']
  #allocation1 [shape = 'u32[144,128]{1,0:T(1,128)}', space=vmem, size = 0x12000, scoped, tag = 'internal scratch']
  %s0 = inlined_call_operand.hbm [shape: f32[8,128], index: 0, kind: input, shape index: {}]
  %s1 = inlined_call_operand.hbm [shape: f32[128,256], index: 1, kind: input, shape index: {}]
  %s2 = inlined_call_operand.vmem [shape: f32[2,128], index: 2, kind: input, shape index: {}]
  %s3 = inlined_call_operand.hbm [shape: f32[128,256], index: 3, kind: input, shape index: {}]
  %s4 = inlined_call_operand.vmem [shape: f32[2,128], index: 4, kind: input, shape index: {}]
  %s5 = inlined_call_operand.hbm [shape: f32[128,256], index: 5, kind: input, shape index: {}]
  %s6 = inlined_call_operand.vmem [shape: f32[2,128], index: 6, kind: input, shape index: {}]
  %s7 = inlined_call_operand.hbm [shape: f32[8,128], index: 7, kind: output, shape index: {}]
  %s8 = sld [smem:[#allocation0]]
  $region54: #{tpu_custom_call.1} parent=0
    _
  %s10 = ssub.s32 1, %s8
  %s11 = scalar_select 0, %s10, %s8
  $region1: #{tpu_custom_call.1} parent=0
    #allocation2 [shape = 'u8[4096]{0}', space=vmem, size = 0x1000, scoped, tag = 'input window, operand 0, single buffered']
    #allocation3 [shape = 's32[1]{0}', space=sflag, size = 0x4, scoped, tag = 'scoped memory for tpu_custom_call.1']
    #allocation4 [shape = 's32[1]{0}', space=sflag, size = 0x4, scoped, tag = 'scoped memory for tpu_custom_call.1']
    #allocation5 [shape = 'u8[131072]{0}', space=vmem, size = 0x20000, scoped, tag = 'input window, operand 1, single buffered']
    #allocation6 [shape = 's32[1]{0}', space=sflag, size = 0x4, scoped, tag = 'scoped memory for tpu_custom_call.1']
    #allocation7 [shape = 'u8[131072]{0}', space=vmem, size = 0x20000, scoped, tag = 'input window, operand 3, single buffered']
    #allocation8 [shape = 'u8[131072]{0}', space=vmem, size = 0x20000, scoped, tag = 'input window, operand 5, single buffered']
    #allocation9 [shape = 's32[1]{0}', space=sflag, size = 0x4, scoped, tag = 'scoped memory for tpu_custom_call.1']
    #allocation10 [shape = 'u8[4096]{0}', space=vmem, size = 0x1000, scoped, tag = 'output window, operand 0, single buffered']
    %12 = vsyncpa [#allocation3], 0
    %13 = vsyncpa [#allocation6], 0
    %14 = vsyncpa [#allocation9], 0
    %15 = vsyncpa [#allocation4], 0
    // Predicated region
    $region2: #{tpu_custom_call.1} parent=1 // pred_check
      _
    $region3: #{tpu_custom_call.1} parent=1 // pred_check_branch
      %17 = sbr.rel (0) target = $region5
    $region4: #{tpu_custom_call.1} parent=1 // pred_region
      %s19 = ssub.s32 128, 128
      %20 = vsyncadd [#allocation3], %s19
      %s22 = sshll.u32 [#allocation2], 4
      %s23 = int_to_ptr.vmem [resolvable:$true] %s22
      %25 = dma.hbm_to_vmem [thread:$0]  %s0, 128, %s23, [#allocation3]
    $region5: #{tpu_custom_call.1} parent=1 // pred_fallthru
      _
    // Predicated region
    $region6: #{tpu_custom_call.1} parent=1 // pred_check
      _
    $region7: #{tpu_custom_call.1} parent=1 // pred_check_branch
      %27 = sbr.rel (0) target = $region9
    $region8: #{tpu_custom_call.1} parent=1 // pred_region
      %s29 = ssub.s32 4096, 4096
      %30 = vsyncadd [#allocation6], %s29
      %s31 = sshll.u32 [#allocation5], 4
      %s32 = int_to_ptr.vmem [resolvable:$true] %s31
      %37 = dma.hbm_to_vmem [thread:$0]  %s1, 4096, %s32, [#allocation6], 256, 256, 16
    $region9: #{tpu_custom_call.1} parent=1 // pred_fallthru
      _
    // Predicated region
    $region10: #{tpu_custom_call.1} parent=1 // pred_check
      _
    $region11: #{tpu_custom_call.1} parent=1 // pred_check_branch
      %39 = sbr.rel (0) target = $region13
    $region12: #{tpu_custom_call.1} parent=1 // pred_region
      _
    $region13: #{tpu_custom_call.1} parent=1 // pred_fallthru
      _
    // Predicated region
    $region14: #{tpu_custom_call.1} parent=1 // pred_check
      _
    $region15: #{tpu_custom_call.1} parent=1 // pred_check_branch
      %41 = sbr.rel (0) target = $region17
    $region16: #{tpu_custom_call.1} parent=1 // pred_region
      %s43 = ssub.s32 4096, 4096
      %44 = vsyncadd [#allocation6], %s43
      %s45 = sshll.u32 [#allocation7], 4
      %s46 = int_to_ptr.vmem [resolvable:$true] %s45
      %51 = dma.hbm_to_vmem [thread:$0]  %s3, 4096, %s46, [#allocation6], 256, 256, 16
    $region17: #{tpu_custom_call.1} parent=1 // pred_fallthru
      _
    // Predicated region
    $region18: #{tpu_custom_call.1} parent=1 // pred_check
      _
    $region19: #{tpu_custom_call.1} parent=1 // pred_check_branch
      %53 = sbr.rel (0) target = $region21
    $region20: #{tpu_custom_call.1} parent=1 // pred_region
      _
    $region21: #{tpu_custom_call.1} parent=1 // pred_fallthru
      _
    // Predicated region
    $region22: #{tpu_custom_call.1} parent=1 // pred_check
      _
    $region23: #{tpu_custom_call.1} parent=1 // pred_check_branch
      %55 = sbr.rel (0) target = $region25
    $region24: #{tpu_custom_call.1} parent=1 // pred_region
      %s57 = ssub.s32 4096, 4096
      %58 = vsyncadd [#allocation9], %s57
      %s59 = sshll.u32 [#allocation8], 4
      %s60 = int_to_ptr.vmem [resolvable:$true] %s59
      %65 = dma.hbm_to_vmem [thread:$0]  %s5, 4096, %s60, [#allocation9], 256, 256, 16
    $region25: #{tpu_custom_call.1} parent=1 // pred_fallthru
      _
    // Predicated region
    $region26: #{tpu_custom_call.1} parent=1 // pred_check
      _
    $region27: #{tpu_custom_call.1} parent=1 // pred_check_branch
      %67 = sbr.rel (0) target = $region29
    $region28: #{tpu_custom_call.1} parent=1 // pred_region
      _
    $region29: #{tpu_custom_call.1} parent=1 // pred_fallthru
      _
    // Predicated region
    $region30: #{tpu_custom_call.1} parent=1 // pred_check
      _
    $region31: #{tpu_custom_call.1} parent=1 // pred_check_branch
      %69 = sbr.rel (0) target = $region33
    $region32: #{tpu_custom_call.1} parent=1 // pred_region
      %70 = dma.done [#allocation3], 128
    $region33: #{tpu_custom_call.1} parent=1 // pred_fallthru
      _
    // Predicated region
    $region34: #{tpu_custom_call.1} parent=1 // pred_check
      _
    $region35: #{tpu_custom_call.1} parent=1 // pred_check_branch
      %72 = sbr.rel (0) target = $region37
    $region36: #{tpu_custom_call.1} parent=1 // pred_region
      %73 = dma.done [#allocation6], 4096
    $region37: #{tpu_custom_call.1} parent=1 // pred_fallthru
      _
    // Predicated region
    $region38: #{tpu_custom_call.1} parent=1 // pred_check
      _
    $region39: #{tpu_custom_call.1} parent=1 // pred_check_branch
      %75 = sbr.rel (0) target = $region41
    $region40: #{tpu_custom_call.1} parent=1 // pred_region
      %76 = dma.done [#allocation6], 4096
    $region41: #{tpu_custom_call.1} parent=1 // pred_fallthru
      _
    // Predicated region
    $region42: #{tpu_custom_call.1} parent=1 // pred_check
      _
    $region43: #{tpu_custom_call.1} parent=1 // pred_check_branch
      %78 = sbr.rel (0) target = $region45
    $region44: #{tpu_custom_call.1} parent=1 // pred_region
      %79 = dma.done [#allocation9], 4096
    $region45: #{tpu_custom_call.1} parent=1 // pred_fallthru
      _
    %v80 = vld [vmem:[#allocation2] sm:$0xff]
    %v81 = vld [vmem:[#allocation5] sm:$0xff]
    %v82 = vld [vmem:[#allocation5 + $0x8] sm:$0xff]
    %v83 = vld [vmem:[#allocation5 + $0x10] sm:$0xff]
    %v84 = vld [vmem:[#allocation5 + $0x18] sm:$0xff]
    %v85 = vld [vmem:[#allocation5 + $0x20] sm:$0xff]
    %v86 = vld [vmem:[#allocation5 + $0x28] sm:$0xff]
    %v87 = vld [vmem:[#allocation5 + $0x30] sm:$0xff]
    %v88 = vld [vmem:[#allocation5 + $0x38] sm:$0xff]
    %v89 = vld [vmem:[#allocation5 + $0x40] sm:$0xff]
    %v90 = vld [vmem:[#allocation5 + $0x48] sm:$0xff]
    %v91 = vld [vmem:[#allocation5 + $0x50] sm:$0xff]
    %v92 = vld [vmem:[#allocation5 + $0x58] sm:$0xff]
    %v93 = vld [vmem:[#allocation5 + $0x60] sm:$0xff]
    %v94 = vld [vmem:[#allocation5 + $0x68] sm:$0xff]
    %v95 = vld [vmem:[#allocation5 + $0x70] sm:$0xff]
    %v96 = vld [vmem:[#allocation5 + $0x78] sm:$0xff]
    %v97 = vld [vmem:[#allocation5 + $0x80] sm:$0xff]
    %v98 = vld [vmem:[#allocation5 + $0x88] sm:$0xff]
    %v99 = vld [vmem:[#allocation5 + $0x90] sm:$0xff]
    %v100 = vld [vmem:[#allocation5 + $0x98] sm:$0xff]
    %v101 = vld [vmem:[#allocation5 + $0xa0] sm:$0xff]
    %v102 = vld [vmem:[#allocation5 + $0xa8] sm:$0xff]
    %v103 = vld [vmem:[#allocation5 + $0xb0] sm:$0xff]
    %v104 = vld [vmem:[#allocation5 + $0xb8] sm:$0xff]
    %v105 = vld [vmem:[#allocation5 + $0xc0] sm:$0xff]
    %v106 = vld [vmem:[#allocation5 + $0xc8] sm:$0xff]
    %v107 = vld [vmem:[#allocation5 + $0xd0] sm:$0xff]
    %v108 = vld [vmem:[#allocation5 + $0xd8] sm:$0xff]
    %v109 = vld [vmem:[#allocation5 + $0xe0] sm:$0xff]
    %v110 = vld [vmem:[#allocation5 + $0xe8] sm:$0xff]
    %v111 = vld [vmem:[#allocation5 + $0xf0] sm:$0xff]
    %v112 = vld [vmem:[#allocation5 + $0xf8] sm:$0xff]
    %113 = vmatprep.subr.mxu0 %v112
    %114 = vmatpush1.msra.mxu0 %v111
    %115 = vmatprep.subr.mxu0 %v110
    %116 = vmatpush1.msra.mxu0 %v109
    %117 = vmatprep.subr.mxu0 %v108
    %118 = vmatpush1.msra.mxu0 %v107
    %119 = vmatprep.subr.mxu0 %v106
    %120 = vmatpush1.msra.mxu0 %v105
    %121 = vmatprep.subr.mxu0 %v104
    %122 = vmatpush1.msra.mxu0 %v103
    %123 = vmatprep.subr.mxu0 %v102
    %124 = vmatpush1.msra.mxu0 %v101
    %125 = vmatprep.subr.mxu0 %v100
    %126 = vmatpush1.msra.mxu0 %v99
    %127 = vmatprep.subr.mxu0 %v98
    %128 = vmatpush1.msra.mxu0 %v97
    %129 = vmatprep.subr.mxu0 %v96
    %130 = vmatpush1.msra.mxu0 %v95
    %131 = vmatprep.subr.mxu0 %v94
    %132 = vmatpush1.msra.mxu0 %v93
    %133 = vmatprep.subr.mxu0 %v92
    %134 = vmatpush1.msra.mxu0 %v91
    %135 = vmatprep.subr.mxu0 %v90
    %136 = vmatpush1.msra.mxu0 %v89
    %137 = vmatprep.subr.mxu0 %v88
    %138 = vmatpush1.msra.mxu0 %v87
    %139 = vmatprep.subr.mxu0 %v86
    %140 = vmatpush1.msra.mxu0 %v85
    %141 = vmatprep.subr.mxu0 %v84
    %142 = vmatpush1.msra.mxu0 %v83
    %143 = vmatprep.subr.mxu0 %v82
    %144 = vmatpush1.msra.mxu0 %v81
    %145 = vmatprep.subr.mxu0 0.0
    %146 = vmatpush2.msra.mxu0 0.0
    %147 = vmatprep.subr.mxu0 0.0
    %148 = vmatpush2.msra.mxu0 0.0
    %149 = vmatprep.subr.mxu0 0.0
    %150 = vmatpush2.msra.mxu0 0.0
    %151 = vmatprep.subr.mxu0 0.0
    %152 = vmatpush2.msra.mxu0 0.0
    %153 = vmatprep.subr.mxu0 0.0
    %154 = vmatpush2.msra.mxu0 0.0
    %155 = vmatprep.subr.mxu0 0.0
    %156 = vmatpush2.msra.mxu0 0.0
    %157 = vmatprep.subr.mxu0 0.0
    %158 = vmatpush2.msra.mxu0 0.0
    %159 = vmatprep.subr.mxu0 0.0
    %160 = vmatpush2.msra.mxu0 0.0
    %161 = vmatprep.subr.mxu0 0.0
    %162 = vmatpush2.msra.mxu0 0.0
    %163 = vmatprep.subr.mxu0 0.0
    %164 = vmatpush2.msra.mxu0 0.0
    %165 = vmatprep.subr.mxu0 0.0
    %166 = vmatpush2.msra.mxu0 0.0
    %167 = vmatprep.subr.mxu0 0.0
    %168 = vmatpush2.msra.mxu0 0.0
    %169 = vmatprep.subr.mxu0 0.0
    %170 = vmatpush2.msra.mxu0 0.0
    %171 = vmatprep.subr.mxu0 0.0
    %172 = vmatpush2.msra.mxu0 0.0
    %173 = vmatprep.subr.mxu0 0.0
    %174 = vmatpush2.msra.mxu0 0.0
    %175 = vmatprep.subr.mxu0 0.0
    %176 = vmatpush2.msra.mxu0 0.0
    %177 = vmatprep.mubr.f32.mxu0 0.0
    %178 = vmatmul.mubr.f32.gmra.mxu0 %v80
    %v179 = vpop.f32.mrf.mxu0
    %v180 = vadd.f32 0.0, %v179
    %v181 = vpop.f32.mrf.mxu0
    %v182 = vadd.f32 0.0, %v181
    %183 = vdwg.mxu0
    %v184 = vld [vmem:[%s2] sm:$0x1]
    %v185 = vld [vmem:[%s2 + $0x1] sm:$0x1]
    %v186 = vlaneseq
    %v187 = vshrl.u32 %v186, 7
    %v188 = vsub.s32 0, %v187
    %v189 = vrot.slane %v184, %v188
    %v190 = vmul.f32 %v182, %v189
    %v191 = vadd.f32 %v180, %v190
    %v192 = vlaneseq
    %v193 = vshrl.u32 %v192, 7
    %v194 = vsub.s32 0, %v193
    %v195 = vrot.slane %v185, %v194
    %v196 = vadd.f32 %v191, %v195
    %v197 = vmax.f32 %v196, 0.0
    %v198 = vld [vmem:[#allocation7] sm:$0xff]
    %v199 = vld [vmem:[#allocation7 + $0x8] sm:$0xff]
    %v200 = vld [vmem:[#allocation7 + $0x10] sm:$0xff]
    %v201 = vld [vmem:[#allocation7 + $0x18] sm:$0xff]
    %v202 = vld [vmem:[#allocation7 + $0x20] sm:$0xff]
    %v203 = vld [vmem:[#allocation7 + $0x28] sm:$0xff]
    %v204 = vld [vmem:[#allocation7 + $0x30] sm:$0xff]
    %v205 = vld [vmem:[#allocation7 + $0x38] sm:$0xff]
    %v206 = vld [vmem:[#allocation7 + $0x40] sm:$0xff]
    %v207 = vld [vmem:[#allocation7 + $0x48] sm:$0xff]
    %v208 = vld [vmem:[#allocation7 + $0x50] sm:$0xff]
    %v209 = vld [vmem:[#allocation7 + $0x58] sm:$0xff]
    %v210 = vld [vmem:[#allocation7 + $0x60] sm:$0xff]
    %v211 = vld [vmem:[#allocation7 + $0x68] sm:$0xff]
    %v212 = vld [vmem:[#allocation7 + $0x70] sm:$0xff]
    %v213 = vld [vmem:[#allocation7 + $0x78] sm:$0xff]
    %v214 = vld [vmem:[#allocation7 + $0x80] sm:$0xff]
    %v215 = vld [vmem:[#allocation7 + $0x88] sm:$0xff]
    %v216 = vld [vmem:[#allocation7 + $0x90] sm:$0xff]
    %v217 = vld [vmem:[#allocation7 + $0x98] sm:$0xff]
    %v218 = vld [vmem:[#allocation7 + $0xa0] sm:$0xff]
    %v219 = vld [vmem:[#allocation7 + $0xa8] sm:$0xff]
    %v220 = vld [vmem:[#allocation7 + $0xb0] sm:$0xff]
    %v221 = vld [vmem:[#allocation7 + $0xb8] sm:$0xff]
    %v222 = vld [vmem:[#allocation7 + $0xc0] sm:$0xff]
    %v223 = vld [vmem:[#allocation7 + $0xc8] sm:$0xff]
    %v224 = vld [vmem:[#allocation7 + $0xd0] sm:$0xff]
    %v225 = vld [vmem:[#allocation7 + $0xd8] sm:$0xff]
    %v226 = vld [vmem:[#allocation7 + $0xe0] sm:$0xff]
    %v227 = vld [vmem:[#allocation7 + $0xe8] sm:$0xff]
    %v228 = vld [vmem:[#allocation7 + $0xf0] sm:$0xff]
    %v229 = vld [vmem:[#allocation7 + $0xf8] sm:$0xff]
    %230 = vmatprep.subr.mxu0 %v229
    %231 = vmatpush1.msra.mxu0 %v228
    %232 = vmatprep.subr.mxu0 %v227
    %233 = vmatpush1.msra.mxu0 %v226
    %234 = vmatprep.subr.mxu0 %v225
    %235 = vmatpush1.msra.mxu0 %v224
    %236 = vmatprep.subr.mxu0 %v223
    %237 = vmatpush1.msra.mxu0 %v222
    %238 = vmatprep.subr.mxu0 %v221
    %239 = vmatpush1.msra.mxu0 %v220
    %240 = vmatprep.subr.mxu0 %v219
    %241 = vmatpush1.msra.mxu0 %v218
    %242 = vmatprep.subr.mxu0 %v217
    %243 = vmatpush1.msra.mxu0 %v216
    %244 = vmatprep.subr.mxu0 %v215
    %245 = vmatpush1.msra.mxu0 %v214
    %246 = vmatprep.subr.mxu0 %v213
    %247 = vmatpush1.msra.mxu0 %v212
    %248 = vmatprep.subr.mxu0 %v211
    %249 = vmatpush1.msra.mxu0 %v210
    %250 = vmatprep.subr.mxu0 %v209
    %251 = vmatpush1.msra.mxu0 %v208
    %252 = vmatprep.subr.mxu0 %v207
    %253 = vmatpush1.msra.mxu0 %v206
    %254 = vmatprep.subr.mxu0 %v205
    %255 = vmatpush1.msra.mxu0 %v204
    %256 = vmatprep.subr.mxu0 %v203
    %257 = vmatpush1.msra.mxu0 %v202
    %258 = vmatprep.subr.mxu0 %v201
    %259 = vmatpush1.msra.mxu0 %v200
    %260 = vmatprep.subr.mxu0 %v199
    %261 = vmatpush1.msra.mxu0 %v198
    %262 = vmatprep.subr.mxu0 0.0
    %263 = vmatpush2.msra.mxu0 0.0
    %264 = vmatprep.subr.mxu0 0.0
    %265 = vmatpush2.msra.mxu0 0.0
    %266 = vmatprep.subr.mxu0 0.0
    %267 = vmatpush2.msra.mxu0 0.0
    %268 = vmatprep.subr.mxu0 0.0
    %269 = vmatpush2.msra.mxu0 0.0
    %270 = vmatprep.subr.mxu0 0.0
    %271 = vmatpush2.msra.mxu0 0.0
    %272 = vmatprep.subr.mxu0 0.0
    %273 = vmatpush2.msra.mxu0 0.0
    %274 = vmatprep.subr.mxu0 0.0
    %275 = vmatpush2.msra.mxu0 0.0
    %276 = vmatprep.subr.mxu0 0.0
    %277 = vmatpush2.msra.mxu0 0.0
    %278 = vmatprep.subr.mxu0 0.0
    %279 = vmatpush2.msra.mxu0 0.0
    %280 = vmatprep.subr.mxu0 0.0
    %281 = vmatpush2.msra.mxu0 0.0
    %282 = vmatprep.subr.mxu0 0.0
    %283 = vmatpush2.msra.mxu0 0.0
    %284 = vmatprep.subr.mxu0 0.0
    %285 = vmatpush2.msra.mxu0 0.0
    %286 = vmatprep.subr.mxu0 0.0
    %287 = vmatpush2.msra.mxu0 0.0
    %288 = vmatprep.subr.mxu0 0.0
    %289 = vmatpush2.msra.mxu0 0.0
    %290 = vmatprep.subr.mxu0 0.0
    %291 = vmatpush2.msra.mxu0 0.0
    %292 = vmatprep.subr.mxu0 0.0
    %293 = vmatpush2.msra.mxu0 0.0
    %294 = vmatprep.mubr.f32.mxu0 0.0
    %295 = vmatmul.mubr.f32.gmra.mxu0 %v197
    %v296 = vpop.f32.mrf.mxu0
    %v297 = vadd.f32 0.0, %v296
    %v298 = vpop.f32.mrf.mxu0
    %v299 = vadd.f32 0.0, %v298
    %300 = vdwg.mxu0
    %v301 = vld [vmem:[%s4] sm:$0x1]
    %v302 = vld [vmem:[%s4 + $0x1] sm:$0x1]
    %v303 = vlaneseq
    %v304 = vshrl.u32 %v303, 7
    %v305 = vsub.s32 0, %v304
    %v306 = vrot.slane %v301, %v305
    %v307 = vmul.f32 %v299, %v306
    %v308 = vadd.f32 %v297, %v307
    %v309 = vlaneseq
    %v310 = vshrl.u32 %v309, 7
    %v311 = vsub.s32 0, %v310
    %v312 = vrot.slane %v302, %v311
    %v313 = vadd.f32 %v308, %v312
    %v314 = vmax.f32 %v313, 0.0
    %v315 = vld [vmem:[#allocation8] sm:$0xff]
    %v316 = vld [vmem:[#allocation8 + $0x8] sm:$0xff]
    %v317 = vld [vmem:[#allocation8 + $0x10] sm:$0xff]
    %v318 = vld [vmem:[#allocation8 + $0x18] sm:$0xff]
    %v319 = vld [vmem:[#allocation8 + $0x20] sm:$0xff]
    %v320 = vld [vmem:[#allocation8 + $0x28] sm:$0xff]
    %v321 = vld [vmem:[#allocation8 + $0x30] sm:$0xff]
    %v322 = vld [vmem:[#allocation8 + $0x38] sm:$0xff]
    %v323 = vld [vmem:[#allocation8 + $0x40] sm:$0xff]
    %v324 = vld [vmem:[#allocation8 + $0x48] sm:$0xff]
    %v325 = vld [vmem:[#allocation8 + $0x50] sm:$0xff]
    %v326 = vld [vmem:[#allocation8 + $0x58] sm:$0xff]
    %v327 = vld [vmem:[#allocation8 + $0x60] sm:$0xff]
    %v328 = vld [vmem:[#allocation8 + $0x68] sm:$0xff]
    %v329 = vld [vmem:[#allocation8 + $0x70] sm:$0xff]
    %v330 = vld [vmem:[#allocation8 + $0x78] sm:$0xff]
    %v331 = vld [vmem:[#allocation8 + $0x80] sm:$0xff]
    %v332 = vld [vmem:[#allocation8 + $0x88] sm:$0xff]
    %v333 = vld [vmem:[#allocation8 + $0x90] sm:$0xff]
    %v334 = vld [vmem:[#allocation8 + $0x98] sm:$0xff]
    %v335 = vld [vmem:[#allocation8 + $0xa0] sm:$0xff]
    %v336 = vld [vmem:[#allocation8 + $0xa8] sm:$0xff]
    %v337 = vld [vmem:[#allocation8 + $0xb0] sm:$0xff]
    %v338 = vld [vmem:[#allocation8 + $0xb8] sm:$0xff]
    %v339 = vld [vmem:[#allocation8 + $0xc0] sm:$0xff]
    %v340 = vld [vmem:[#allocation8 + $0xc8] sm:$0xff]
    %v341 = vld [vmem:[#allocation8 + $0xd0] sm:$0xff]
    %v342 = vld [vmem:[#allocation8 + $0xd8] sm:$0xff]
    %v343 = vld [vmem:[#allocation8 + $0xe0] sm:$0xff]
    %v344 = vld [vmem:[#allocation8 + $0xe8] sm:$0xff]
    %v345 = vld [vmem:[#allocation8 + $0xf0] sm:$0xff]
    %v346 = vld [vmem:[#allocation8 + $0xf8] sm:$0xff]
    %347 = vmatprep.subr.mxu0 %v346
    %348 = vmatpush1.msra.mxu0 %v345
    %349 = vmatprep.subr.mxu0 %v344
    %350 = vmatpush1.msra.mxu0 %v343
    %351 = vmatprep.subr.mxu0 %v342
    %352 = vmatpush1.msra.mxu0 %v341
    %353 = vmatprep.subr.mxu0 %v340
    %354 = vmatpush1.msra.mxu0 %v339
    %355 = vmatprep.subr.mxu0 %v338
    %356 = vmatpush1.msra.mxu0 %v337
    %357 = vmatprep.subr.mxu0 %v336
    %358 = vmatpush1.msra.mxu0 %v335
    %359 = vmatprep.subr.mxu0 %v334
    %360 = vmatpush1.msra.mxu0 %v333
    %361 = vmatprep.subr.mxu0 %v332
    %362 = vmatpush1.msra.mxu0 %v331
    %363 = vmatprep.subr.mxu0 %v330
    %364 = vmatpush1.msra.mxu0 %v329
    %365 = vmatprep.subr.mxu0 %v328
    %366 = vmatpush1.msra.mxu0 %v327
    %367 = vmatprep.subr.mxu0 %v326
    %368 = vmatpush1.msra.mxu0 %v325
    %369 = vmatprep.subr.mxu0 %v324
    %370 = vmatpush1.msra.mxu0 %v323
    %371 = vmatprep.subr.mxu0 %v322
    %372 = vmatpush1.msra.mxu0 %v321
    %373 = vmatprep.subr.mxu0 %v320
    %374 = vmatpush1.msra.mxu0 %v319
    %375 = vmatprep.subr.mxu0 %v318
    %376 = vmatpush1.msra.mxu0 %v317
    %377 = vmatprep.subr.mxu0 %v316
    %378 = vmatpush1.msra.mxu0 %v315
    %379 = vmatprep.subr.mxu0 0.0
    %380 = vmatpush2.msra.mxu0 0.0
    %381 = vmatprep.subr.mxu0 0.0
    %382 = vmatpush2.msra.mxu0 0.0
    %383 = vmatprep.subr.mxu0 0.0
    %384 = vmatpush2.msra.mxu0 0.0
    %385 = vmatprep.subr.mxu0 0.0
    %386 = vmatpush2.msra.mxu0 0.0
    %387 = vmatprep.subr.mxu0 0.0
    %388 = vmatpush2.msra.mxu0 0.0
    %389 = vmatprep.subr.mxu0 0.0
    %390 = vmatpush2.msra.mxu0 0.0
    %391 = vmatprep.subr.mxu0 0.0
    %392 = vmatpush2.msra.mxu0 0.0
    %393 = vmatprep.subr.mxu0 0.0
    %394 = vmatpush2.msra.mxu0 0.0
    %395 = vmatprep.subr.mxu0 0.0
    %396 = vmatpush2.msra.mxu0 0.0
    %397 = vmatprep.subr.mxu0 0.0
    %398 = vmatpush2.msra.mxu0 0.0
    %399 = vmatprep.subr.mxu0 0.0
    %400 = vmatpush2.msra.mxu0 0.0
    %401 = vmatprep.subr.mxu0 0.0
    %402 = vmatpush2.msra.mxu0 0.0
    %403 = vmatprep.subr.mxu0 0.0
    %404 = vmatpush2.msra.mxu0 0.0
    %405 = vmatprep.subr.mxu0 0.0
    %406 = vmatpush2.msra.mxu0 0.0
    %407 = vmatprep.subr.mxu0 0.0
    %408 = vmatpush2.msra.mxu0 0.0
    %409 = vmatprep.subr.mxu0 0.0
    %410 = vmatpush2.msra.mxu0 0.0
    %411 = vmatprep.mubr.f32.mxu0 0.0
    %412 = vmatmul.mubr.f32.gmra.mxu0 %v314
    %v413 = vpop.f32.mrf.mxu0
    %v414 = vadd.f32 0.0, %v413
    %v415 = vpop.f32.mrf.mxu0
    %v416 = vadd.f32 0.0, %v415
    %417 = vdwg.mxu0
    %v418 = vld [vmem:[%s6] sm:$0x1]
    %v419 = vld [vmem:[%s6 + $0x1] sm:$0x1]
    %v420 = vlaneseq
    %v421 = vshrl.u32 %v420, 7
    %v422 = vsub.s32 0, %v421
    %v423 = vrot.slane %v418, %v422
    %v424 = vmul.f32 %v416, %v423
    %v425 = vadd.f32 %v414, %v424
    %v426 = vlaneseq
    %v427 = vshrl.u32 %v426, 7
    %v428 = vsub.s32 0, %v427
    %v429 = vrot.slane %v419, %v428
    %v430 = vadd.f32 %v425, %v429
    %431 = vst [vmem:[#allocation10] sm:$0xff] %v430
    // Predicated region
    $region46: #{tpu_custom_call.1} parent=1 // pred_check
      _
    $region47: #{tpu_custom_call.1} parent=1 // pred_check_branch
      %433 = sbr.rel (0) target = $region49
    $region48: #{tpu_custom_call.1} parent=1 // pred_region
      %s435 = ssub.s32 128, 128
      %436 = vsyncadd [#allocation4], %s435
      %s438 = sshll.u32 [#allocation10], 4
      %s439 = int_to_ptr.vmem [resolvable:$true] %s438
      %441 = dma.vmem_to_hbm [thread:$0]  %s439, 128, %s7, [#allocation4]
    $region49: #{tpu_custom_call.1} parent=1 // pred_fallthru
      _
    // Predicated region
    $region50: #{tpu_custom_call.1} parent=1 // pred_check
      _
    $region51: #{tpu_custom_call.1} parent=1 // pred_check_branch
      %443 = sbr.rel (0) target = $region53
    $region52: #{tpu_custom_call.1} parent=1 // pred_region
      %444 = dma.done [#allocation4], 128
    $region53: #{tpu_custom_call.1} parent=1 // pred_fallthru
      _
    %445 = vsyncpa [#allocation3], 1
    %446 = vsyncpa [#allocation6], 1
    %447 = vsyncpa [#allocation9], 1
    %448 = vsyncpa [#allocation4], 1

</llo_original>
